<compile_context>
chip_gen: v7x
topology: tpu7x:2x2x1
jax: 0.10.0
libtpu: 0.0.40
codegen_flags: <defaults>
</compile_context>

<pallas_src>
import jax
import jax.numpy as jnp
from jax.experimental import pallas as pl
from jax.experimental.pallas import tpu as pltpu


def _round_up(n, m):
    return ((n + m - 1) // m) * m


def _make_mlp_kernel(compute_dtype):
    """Fused forward: 4 x (Linear + Tanh) then a final Linear (transposed layout)."""

    def kernel(x_ref,
               w0_ref, b0_ref,
               w1_ref, b1_ref,
               w2_ref, b2_ref,
               w3_ref, b3_ref,
               w4_ref, b4_ref,
               o_ref):
        def layer(h, w_ref, b_ref, activate):
            # MXU matmul: (out_feat, in_feat) @ (in_feat, batch_tile), f32 accum.
            acc = jnp.dot(w_ref[...], h, preferred_element_type=jnp.float32)
            acc = acc + b_ref[...]           # (out_feat, 1) broadcasts over lanes
            if activate:
                return jnp.tanh(acc).astype(compute_dtype)   # tanh on the EUP
            return acc                                        # final layer: f32

        h = x_ref[...]
        h = layer(h, w0_ref, b0_ref, True)
        h = layer(h, w1_ref, b1_ref, True)
        h = layer(h, w2_ref, b2_ref, True)
        h = layer(h, w3_ref, b3_ref, True)
        o_ref[...] = layer(h, w4_ref, b4_ref, False).astype(o_ref.dtype)

    return kernel


def k_generator_forward(x, params, *, batch_tile=128,
                        compute_dtype=jnp.float32):
    """Run the fused MLP Pallas kernel.

    x:      (B, in_dim) float32
    params: list of 5 (W, b) pairs, W: (out_feat, in_feat), b: (out_feat,) or
            (out_feat, 1) — same orientation as torch.nn.Linear.
    """
    assert len(params) == 5, "kernel is specialized for 4 hidden layers + output"
    B, in_dim = x.shape
    out_dim = params[-1][0].shape[0]

    # ---- pad feature dims to sublane multiples of 8 (zero padding is exact) ----
    dims = [in_dim] + [w.shape[0] for (w, _) in params]       # layer io dims
    dims_p = [_round_up(d, 8) for d in dims]

    # ---- pad batch to a multiple of the lane-dense tile, put batch on lanes ----
    num_tiles = pl.cdiv(B, batch_tile)
    b_pad = num_tiles * batch_tile
    x_p = jnp.zeros((dims_p[0], b_pad), compute_dtype)
    x_p = x_p.at[:in_dim, :B].set(x.T.astype(compute_dtype))   # (in_pad, b_pad)

    # x is tiled over batch (lanes); weights/biases are small and block-resident
    # (constant index_map -> fetched once, reused across all grid steps).
    in_specs = [pl.BlockSpec((dims_p[0], batch_tile), lambda i: (0, i))]
    flat_params = []
    for li, (w, b) in enumerate(params):
        o_p, i_p = dims_p[li + 1], dims_p[li]
        w_p = jnp.zeros((o_p, i_p), compute_dtype).at[:w.shape[0], :w.shape[1]].set(
            w.astype(compute_dtype))
        b_p = jnp.zeros((o_p, 1), jnp.float32).at[:w.shape[0], :].set(
            b.reshape(-1, 1).astype(jnp.float32))
        in_specs.append(pl.BlockSpec(w_p.shape, lambda i: (0, 0)))
        in_specs.append(pl.BlockSpec(b_p.shape, lambda i: (0, 0)))
        flat_params.extend([w_p, b_p])

    out_pad = dims_p[-1]
    out_specs = pl.BlockSpec((out_pad, batch_tile), lambda i: (0, i))

    out_t = pl.pallas_call(
        _make_mlp_kernel(compute_dtype),
        out_shape=jax.ShapeDtypeStruct((out_pad, b_pad), jnp.float32),
        grid=(num_tiles,),
        in_specs=in_specs,
        out_specs=out_specs,
        compiler_params=pltpu.CompilerParams(
            dimension_semantics=("parallel",)),
    )(x_p, *flat_params)

    return out_t[:out_dim, :B].T                       # back to (B, out_dim)


def init_k_generator_params(key, in_dim, out_dim, hid_dim=50, num_layers=4):
    """Deterministic synthetic init matching K_Generator's layer shapes.

    Returns (W, b) with W: (out_feat, in_feat), b: (out_feat, 1) — the same
    orientation as torch.nn.Linear.weight / .bias.
    """
    dims = [in_dim] + [hid_dim] * num_layers + [out_dim]
    params = []
    for li in range(len(dims) - 1):
        key, kw, kb = jax.random.split(key, 3)
        fan_in, fan_out = dims[li], dims[li + 1]
        bound = 1.0 / jnp.sqrt(jnp.float32(fan_in))
        w = jax.random.uniform(kw, (fan_out, fan_in), jnp.float32, -bound, bound)
        b = jax.random.uniform(kb, (fan_out, 1), jnp.float32, -bound, bound)
        params.append((w, b))
    return params


def k_generator_reference(x, params):
    h = x
    for (w, b) in params[:-1]:
        h = jnp.tanh(h @ w.T + b.reshape(1, -1))
    w, b = params[-1]
    return h @ w.T + b.reshape(1, -1)


if __name__ == "__main__":
    key = jax.random.PRNGKey(0)
    k_x, k_p = jax.random.split(key)

    # Small but lane-friendly: 2 parallel grid steps of 128 batch columns each
    # (also exercises the v7x two-TensorCore split). hid_dim=50 matches the
    # PyTorch module's default.
    B, in_dim, hid_dim, out_dim = 256, 16, 50, 8
    x = jax.random.normal(k_x, (B, in_dim), jnp.float32)
    params = init_k_generator_params(k_p, in_dim, out_dim, hid_dim=hid_dim,
                                     num_layers=4)

    out = k_generator_forward(x, params, batch_tile=128,
                              compute_dtype=jnp.float32)
    out = jax.block_until_ready(out)

    ref = k_generator_reference(x, params)
    assert out.shape == (B, out_dim)
    assert jnp.allclose(out, ref, atol=1e-5, rtol=1e-5), "mismatch vs reference"

    print("KERNEL_OK")
</pallas_src>

<mosaic_0001>
module attributes {stable_mosaic.version = 11 : i64} {
  func.func @kernel(%arg0: i32, %arg1: memref<16x128xf32, #tpu.memory_space<vmem>>, %arg2: memref<56x16xf32, #tpu.memory_space<vmem>>, %arg3: memref<56x1xf32, #tpu.memory_space<vmem>>, %arg4: memref<56x56xf32, #tpu.memory_space<vmem>>, %arg5: memref<56x1xf32, #tpu.memory_space<vmem>>, %arg6: memref<56x56xf32, #tpu.memory_space<vmem>>, %arg7: memref<56x1xf32, #tpu.memory_space<vmem>>, %arg8: memref<56x56xf32, #tpu.memory_space<vmem>>, %arg9: memref<56x1xf32, #tpu.memory_space<vmem>>, %arg10: memref<8x56xf32, #tpu.memory_space<vmem>>, %arg11: memref<8x1xf32, #tpu.memory_space<vmem>>, %arg12: memref<8x128xf32, #tpu.memory_space<vmem>>) attributes {dimension_semantics = [#tpu.dimension_semantics<parallel>], iteration_bounds = array<i64: 2>, scalar_prefetch = 0 : i64, scratch_operands = 0 : i64, tpu.core_type = #tpu.core_type<tc>, window_params = [{transform_indices = @transform_0, window_bounds = array<i64: 16, 128>}, {pipeline_mode = #tpu.pipeline_mode<synchronous>, transform_indices = @transform_1, window_bounds = array<i64: 56, 16>}, {pipeline_mode = #tpu.pipeline_mode<synchronous>, transform_indices = @transform_2, window_bounds = array<i64: 56, 1>}, {pipeline_mode = #tpu.pipeline_mode<synchronous>, transform_indices = @transform_3, window_bounds = array<i64: 56, 56>}, {pipeline_mode = #tpu.pipeline_mode<synchronous>, transform_indices = @transform_4, window_bounds = array<i64: 56, 1>}, {pipeline_mode = #tpu.pipeline_mode<synchronous>, transform_indices = @transform_5, window_bounds = array<i64: 56, 56>}, {pipeline_mode = #tpu.pipeline_mode<synchronous>, transform_indices = @transform_6, window_bounds = array<i64: 56, 1>}, {pipeline_mode = #tpu.pipeline_mode<synchronous>, transform_indices = @transform_7, window_bounds = array<i64: 56, 56>}, {pipeline_mode = #tpu.pipeline_mode<synchronous>, transform_indices = @transform_8, window_bounds = array<i64: 56, 1>}, {pipeline_mode = #tpu.pipeline_mode<synchronous>, transform_indices = @transform_9, window_bounds = array<i64: 8, 56>}, {pipeline_mode = #tpu.pipeline_mode<synchronous>, transform_indices = @transform_10, window_bounds = array<i64: 8, 1>}, {transform_indices = @transform_11, window_bounds = array<i64: 8, 128>}]} {
    %c0 = arith.constant 0 : index
    %c0_0 = arith.constant 0 : index
    %0 = vector.load %arg1[%c0, %c0_0] : memref<16x128xf32, #tpu.memory_space<vmem>>, vector<16x128xf32>
    %c0_1 = arith.constant 0 : index
    %c0_2 = arith.constant 0 : index
    %1 = vector.load %arg2[%c0_1, %c0_2] : memref<56x16xf32, #tpu.memory_space<vmem>>, vector<56x16xf32>
    %cst = arith.constant dense<0.000000e+00> : vector<56x128xf32>
    %2 = tpu.matmul %1, %0, %cst {dimension_numbers = #tpu.dot_dimension_numbers<[1], [0], [0], [1], [0, 0, 1, 1], [], []>} : vector<56x16xf32>, vector<16x128xf32>, vector<56x128xf32> -> vector<56x128xf32>
    %c0_3 = arith.constant 0 : index
    %c0_4 = arith.constant 0 : index
    %3 = vector.load %arg3[%c0_3, %c0_4] : memref<56x1xf32, #tpu.memory_space<vmem>>, vector<56x1xf32>
    %4 = vector.broadcast %3 : vector<56x1xf32> to vector<56x128xf32>
    %5 = arith.addf %2, %4 : vector<56x128xf32>
    %6 = math.tanh %5 : vector<56x128xf32>
    %c0_5 = arith.constant 0 : index
    %c0_6 = arith.constant 0 : index
    %7 = vector.load %arg4[%c0_5, %c0_6] : memref<56x56xf32, #tpu.memory_space<vmem>>, vector<56x56xf32>
    %cst_7 = arith.constant dense<0.000000e+00> : vector<56x128xf32>
    %8 = tpu.matmul %7, %6, %cst_7 {dimension_numbers = #tpu.dot_dimension_numbers<[1], [0], [0], [1], [0, 0, 1, 1], [], []>} : vector<56x56xf32>, vector<56x128xf32>, vector<56x128xf32> -> vector<56x128xf32>
    %c0_8 = arith.constant 0 : index
    %c0_9 = arith.constant 0 : index
    %9 = vector.load %arg5[%c0_8, %c0_9] : memref<56x1xf32, #tpu.memory_space<vmem>>, vector<56x1xf32>
    %10 = vector.broadcast %9 : vector<56x1xf32> to vector<56x128xf32>
    %11 = arith.addf %8, %10 : vector<56x128xf32>
    %12 = math.tanh %11 : vector<56x128xf32>
    %c0_10 = arith.constant 0 : index
    %c0_11 = arith.constant 0 : index
    %13 = vector.load %arg6[%c0_10, %c0_11] : memref<56x56xf32, #tpu.memory_space<vmem>>, vector<56x56xf32>
    %cst_12 = arith.constant dense<0.000000e+00> : vector<56x128xf32>
    %14 = tpu.matmul %13, %12, %cst_12 {dimension_numbers = #tpu.dot_dimension_numbers<[1], [0], [0], [1], [0, 0, 1, 1], [], []>} : vector<56x56xf32>, vector<56x128xf32>, vector<56x128xf32> -> vector<56x128xf32>
    %c0_13 = arith.constant 0 : index
    %c0_14 = arith.constant 0 : index
    %15 = vector.load %arg7[%c0_13, %c0_14] : memref<56x1xf32, #tpu.memory_space<vmem>>, vector<56x1xf32>
    %16 = vector.broadcast %15 : vector<56x1xf32> to vector<56x128xf32>
    %17 = arith.addf %14, %16 : vector<56x128xf32>
    %18 = math.tanh %17 : vector<56x128xf32>
    %c0_15 = arith.constant 0 : index
    %c0_16 = arith.constant 0 : index
    %19 = vector.load %arg8[%c0_15, %c0_16] : memref<56x56xf32, #tpu.memory_space<vmem>>, vector<56x56xf32>
    %cst_17 = arith.constant dense<0.000000e+00> : vector<56x128xf32>
    %20 = tpu.matmul %19, %18, %cst_17 {dimension_numbers = #tpu.dot_dimension_numbers<[1], [0], [0], [1], [0, 0, 1, 1], [], []>} : vector<56x56xf32>, vector<56x128xf32>, vector<56x128xf32> -> vector<56x128xf32>
    %c0_18 = arith.constant 0 : index
    %c0_19 = arith.constant 0 : index
    %21 = vector.load %arg9[%c0_18, %c0_19] : memref<56x1xf32, #tpu.memory_space<vmem>>, vector<56x1xf32>
    %22 = vector.broadcast %21 : vector<56x1xf32> to vector<56x128xf32>
    %23 = arith.addf %20, %22 : vector<56x128xf32>
    %24 = math.tanh %23 : vector<56x128xf32>
    %c0_20 = arith.constant 0 : index
    %c0_21 = arith.constant 0 : index
    %25 = vector.load %arg10[%c0_20, %c0_21] : memref<8x56xf32, #tpu.memory_space<vmem>>, vector<8x56xf32>
    %cst_22 = arith.constant dense<0.000000e+00> : vector<8x128xf32>
    %26 = tpu.matmul %25, %24, %cst_22 {dimension_numbers = #tpu.dot_dimension_numbers<[1], [0], [0], [1], [0, 0, 1, 1], [], []>} : vector<8x56xf32>, vector<56x128xf32>, vector<8x128xf32> -> vector<8x128xf32>
    %c0_23 = arith.constant 0 : index
    %c0_24 = arith.constant 0 : index
    %27 = vector.load %arg11[%c0_23, %c0_24] : memref<8x1xf32, #tpu.memory_space<vmem>>, vector<8x1xf32>
    %28 = vector.broadcast %27 : vector<8x1xf32> to vector<8x128xf32>
    %29 = arith.addf %26, %28 : vector<8x128xf32>
    %c0_25 = arith.constant 0 : index
    %c0_26 = arith.constant 0 : index
    %30 = vector.load %arg12[%c0_25, %c0_26] : memref<8x128xf32, #tpu.memory_space<vmem>>, vector<8x128xf32>
    tpu.vector_store %arg12[%c0_25, %c0_26], %29 {strides = array<i32>} : memref<8x128xf32, #tpu.memory_space<vmem>>, vector<8x128xf32>,
    return
  }
  func.func @transform_0(%arg0: i32) -> (i32, i32) {
    %c0_i32 = arith.constant 0 : i32
    %c0_i32_0 = arith.constant 0 : i32
    return %c0_i32, %arg0 : i32, i32
  }
  func.func @transform_1(%arg0: i32) -> (i32, i32) {
    %c0_i32 = arith.constant 0 : i32
    %c0_i32_0 = arith.constant 0 : i32
    %c0_i32_1 = arith.constant 0 : i32
    return %c0_i32, %c0_i32_0 : i32, i32
  }
  func.func @transform_2(%arg0: i32) -> (i32, i32) {
    %c0_i32 = arith.constant 0 : i32
    %c0_i32_0 = arith.constant 0 : i32
    %c0_i32_1 = arith.constant 0 : i32
    return %c0_i32, %c0_i32_0 : i32, i32
  }
  func.func @transform_3(%arg0: i32) -> (i32, i32) {
    %c0_i32 = arith.constant 0 : i32
    %c0_i32_0 = arith.constant 0 : i32
    %c0_i32_1 = arith.constant 0 : i32
    return %c0_i32, %c0_i32_0 : i32, i32
  }
  func.func @transform_4(%arg0: i32) -> (i32, i32) {
    %c0_i32 = arith.constant 0 : i32
    %c0_i32_0 = arith.constant 0 : i32
    %c0_i32_1 = arith.constant 0 : i32
    return %c0_i32, %c0_i32_0 : i32, i32
  }
  func.func @transform_5(%arg0: i32) -> (i32, i32) {
    %c0_i32 = arith.constant 0 : i32
    %c0_i32_0 = arith.constant 0 : i32
    %c0_i32_1 = arith.constant 0 : i32
    return %c0_i32, %c0_i32_0 : i32, i32
  }
  func.func @transform_6(%arg0: i32) -> (i32, i32) {
    %c0_i32 = arith.constant 0 : i32
    %c0_i32_0 = arith.constant 0 : i32
    %c0_i32_1 = arith.constant 0 : i32
    return %c0_i32, %c0_i32_0 : i32, i32
  }
  func.func @transform_7(%arg0: i32) -> (i32, i32) {
    %c0_i32 = arith.constant 0 : i32
    %c0_i32_0 = arith.constant 0 : i32
    %c0_i32_1 = arith.constant 0 : i32
    return %c0_i32, %c0_i32_0 : i32, i32
  }
  func.func @transform_8(%arg0: i32) -> (i32, i32) {
    %c0_i32 = arith.constant 0 : i32
    %c0_i32_0 = arith.constant 0 : i32
    %c0_i32_1 = arith.constant 0 : i32
    return %c0_i32, %c0_i32_0 : i32, i32
  }
  func.func @transform_9(%arg0: i32) -> (i32, i32) {
    %c0_i32 = arith.constant 0 : i32
    %c0_i32_0 = arith.constant 0 : i32
    %c0_i32_1 = arith.constant 0 : i32
    return %c0_i32, %c0_i32_0 : i32, i32
  }
  func.func @transform_10(%arg0: i32) -> (i32, i32) {
    %c0_i32 = arith.constant 0 : i32
    %c0_i32_0 = arith.constant 0 : i32
    %c0_i32_1 = arith.constant 0 : i32
    return %c0_i32, %c0_i32_0 : i32, i32
  }
  func.func @transform_11(%arg0: i32) -> (i32, i32) {
    %c0_i32 = arith.constant 0 : i32
    %c0_i32_0 = arith.constant 0 : i32
    return %c0_i32, %arg0 : i32, i32
  }
}

</mosaic_0001>

<llo_original>
// kernel: tpu_custom_call.1
$region0: #{tpu_custom_call.1}
  #allocation0 [shape = 'u32[]', space=smem, size = 0x4, offset = 0x4, fixed_abs, tag = 'smem constant byte address 0x4 - core index']
  #allocation1 [shape = 'u32[144,128]{1,0:T(1,128)}', space=vmem, size = 0x12000, scoped, tag = 'internal scratch']
  %s0 = inlined_call_operand.vmem [shape: f32[16,256], index: 0, kind: input, shape index: {}]
  %s1 = inlined_call_operand.vmem [shape: f32[56,16], index: 1, kind: input, shape index: {}]
  %s2 = inlined_call_operand.vmem [shape: f32[56,1], index: 2, kind: input, shape index: {}]
  %s3 = inlined_call_operand.vmem [shape: f32[56,56], index: 3, kind: input, shape index: {}]
  %s4 = inlined_call_operand.vmem [shape: f32[56,1], index: 4, kind: input, shape index: {}]
  %s5 = inlined_call_operand.vmem [shape: f32[56,56], index: 5, kind: input, shape index: {}]
  %s6 = inlined_call_operand.vmem [shape: f32[56,1], index: 6, kind: input, shape index: {}]
  %s7 = inlined_call_operand.vmem [shape: f32[56,56], index: 7, kind: input, shape index: {}]
  %s8 = inlined_call_operand.vmem [shape: f32[56,1], index: 8, kind: input, shape index: {}]
  %s9 = inlined_call_operand.vmem [shape: f32[8,56], index: 9, kind: input, shape index: {}]
  %s10 = inlined_call_operand.vmem [shape: f32[8,1], index: 10, kind: input, shape index: {}]
  %s11 = inlined_call_operand.hbm [shape: f32[8,256], index: 11, kind: output, shape index: {}]
  %s12 = sld [smem:[#allocation0]]
  $region115: #{tpu_custom_call.1} parent=0
    _
  %s14 = ssub.s32 1, %s12
  %s15 = scalar_select 0, %s14, %s12
  $region1: #{tpu_custom_call.1} parent=0
    #allocation2 [shape = 'u8[16384]{0}', space=vmem, size = 0x4000, scoped, tag = 'input window, operand 0']
    #allocation3 [shape = 'u8[8192]{0}', space=vmem, size = 0x2000, scoped, tag = 'output window, operand 0']
    #allocation4 [shape = 's32[2]{0}', space=sflag, size = 0x8, scoped, tag = 'scoped memory for tpu_custom_call.1']
    %16 = vsyncpa [#allocation4], 0
    %s17 = scalar_lea.sflag [#allocation4], 1
    %18 = vsyncpa %s17, 0
    loop: start=0, step=1, limit=4
    $region2: #{tpu_custom_call.1} parent=1 // loop_pre_header
      _
    $region3: #{tpu_custom_call.1} parent=1 // loop_header
      %s20 = sphi 0, %s24
      %p21 = scmp.ge.s32.totalorder %s20, 4
      %s30 = sphi 0, %s32
      %s33 = sphi 0, %s30
      %s34 = sphi 0, %s33
      %s50 = sphi 0, %s34
      %s54 = sphi 0, %s54
      %s56 = sphi 0, %s54
      %s57 = sphi 0, %s56
      %s71 = sphi 0, %s57
      %s75 = sphi 0, %s75
      %s77 = sphi 0, %s75
      %s78 = sphi 0, %s77
      %s92 = sphi 0, %s78
      %s96 = sphi 0, %s96
      %s98 = sphi 0, %s96
      %s99 = sphi 0, %s98
      %s113 = sphi 0, %s99
      %s117 = sphi 0, %s117
      %s119 = sphi 0, %s117
      %s120 = sphi 0, %s119
      %s134 = sphi 0, %s120
      %s138 = sphi 0, %s138
      %s140 = sphi 0, %s138
      %s141 = sphi 0, %s140
      %s155 = sphi 0, %s141
      %s159 = sphi 0, %s159
      %s161 = sphi 0, %s159
      %s162 = sphi 0, %s161
      %s176 = sphi 0, %s162
      %s180 = sphi 0, %s180
      %s182 = sphi 0, %s180
      %s183 = sphi 0, %s182
      %s197 = sphi 0, %s183
      %s201 = sphi 0, %s201
      %s203 = sphi 0, %s201
      %s204 = sphi 0, %s203
      %s218 = sphi 0, %s204
      %s222 = sphi 0, %s222
      %s224 = sphi 0, %s222
      %s225 = sphi 0, %s224
      %s239 = sphi 0, %s225
      %s243 = sphi 0, %s243
      %s245 = sphi 0, %s243
      %s246 = sphi 0, %s245
      %s260 = sphi 0, %s246
      %s266 = sphi 0, %s268
      %s269 = sphi 0, %s266
      %s270 = sphi 0, %s269
      %s286 = sphi 0, %s270
    $region4: #{tpu_custom_call.1} parent=1 // loop_header_branch
      %23 = sbr.rel (%p21) target = $region8
    $region5: #{tpu_custom_call.1} parent=1 // loop_body
      %s25 = ssub.s32 %s20, 1
      %s26 = ssub.s32 %s20, 2
      %s27 = sadd.s32 %s20, 1
      %s28 = ssub.s32 %s20, %s27
      %p29 = scmp.eq.s32.totalorder %s28, 0
      %s31 = sadd.s32 %s30, 1
      %s32 = scalar_select %p29, %s30, %s31
      %p35 = pneg %p29
      %p36 = scmp.eq.s32.totalorder %s20, 1
      %p37 = por %p35, %p36
      %p38 = scmp.ne.s32.totalorder %s30, %s33
      %p39 = scmp.eq.s32.totalorder %s20, 0
      %p40 = por %p38, %p39
      %p41 = scmp.ne.s32.totalorder %s30, %s33
      %p42 = scmp.eq.s32.totalorder %s25, 1
      %p43 = por %p41, %p42
      %p44 = scmp.ne.s32.totalorder %s33, %s34
      %p45 = scmp.eq.s32.totalorder %s25, 0
      %p46 = por %p44, %p45
      %p47 = scmp.ne.s32.totalorder %s33, %s34
      %p48 = scmp.eq.s32.totalorder %s26, 1
      %p49 = por %p47, %p48
      %p51 = scmp.ne.s32.totalorder %s34, %s50
      %p52 = scmp.eq.s32.totalorder %s26, 0
      %p53 = por %p51, %p52
      %s55 = sadd.s32 %s54, 1
      %p58 = scmp.eq.s32.totalorder %s20, 1
      %p59 = scmp.ne.s32.totalorder %s54, %s56
      %p60 = scmp.eq.s32.totalorder %s20, 0
      %p61 = por %p59, %p60
      %p62 = scmp.ne.s32.totalorder %s54, %s56
      %p63 = scmp.eq.s32.totalorder %s25, 1
      %p64 = por %p62, %p63
      %p65 = scmp.ne.s32.totalorder %s56, %s57
      %p66 = scmp.eq.s32.totalorder %s25, 0
      %p67 = por %p65, %p66
      %p68 = scmp.ne.s32.totalorder %s56, %s57
      %p69 = scmp.eq.s32.totalorder %s26, 1
      %p70 = por %p68, %p69
      %p72 = scmp.ne.s32.totalorder %s57, %s71
      %p73 = scmp.eq.s32.totalorder %s26, 0
      %p74 = por %p72, %p73
      %s76 = sadd.s32 %s75, 1
      %p79 = scmp.eq.s32.totalorder %s20, 1
      %p80 = scmp.ne.s32.totalorder %s75, %s77
      %p81 = scmp.eq.s32.totalorder %s20, 0
      %p82 = por %p80, %p81
      %p83 = scmp.ne.s32.totalorder %s75, %s77
      %p84 = scmp.eq.s32.totalorder %s25, 1
      %p85 = por %p83, %p84
      %p86 = scmp.ne.s32.totalorder %s77, %s78
      %p87 = scmp.eq.s32.totalorder %s25, 0
      %p88 = por %p86, %p87
      %p89 = scmp.ne.s32.totalorder %s77, %s78
      %p90 = scmp.eq.s32.totalorder %s26, 1
      %p91 = por %p89, %p90
      %p93 = scmp.ne.s32.totalorder %s78, %s92
      %p94 = scmp.eq.s32.totalorder %s26, 0
      %p95 = por %p93, %p94
      %s97 = sadd.s32 %s96, 1
      %p100 = scmp.eq.s32.totalorder %s20, 1
      %p101 = scmp.ne.s32.totalorder %s96, %s98
      %p102 = scmp.eq.s32.totalorder %s20, 0
      %p103 = por %p101, %p102
      %p104 = scmp.ne.s32.totalorder %s96, %s98
      %p105 = scmp.eq.s32.totalorder %s25, 1
      %p106 = por %p104, %p105
      %p107 = scmp.ne.s32.totalorder %s98, %s99
      %p108 = scmp.eq.s32.totalorder %s25, 0
      %p109 = por %p107, %p108
      %p110 = scmp.ne.s32.totalorder %s98, %s99
      %p111 = scmp.eq.s32.totalorder %s26, 1
      %p112 = por %p110, %p111
      %p114 = scmp.ne.s32.totalorder %s99, %s113
      %p115 = scmp.eq.s32.totalorder %s26, 0
      %p116 = por %p114, %p115
      %s118 = sadd.s32 %s117, 1
      %p121 = scmp.eq.s32.totalorder %s20, 1
      %p122 = scmp.ne.s32.totalorder %s117, %s119
      %p123 = scmp.eq.s32.totalorder %s20, 0
      %p124 = por %p122, %p123
      %p125 = scmp.ne.s32.totalorder %s117, %s119
      %p126 = scmp.eq.s32.totalorder %s25, 1
      %p127 = por %p125, %p126
      %p128 = scmp.ne.s32.totalorder %s119, %s120
      %p129 = scmp.eq.s32.totalorder %s25, 0
      %p130 = por %p128, %p129
      %p131 = scmp.ne.s32.totalorder %s119, %s120
      %p132 = scmp.eq.s32.totalorder %s26, 1
      %p133 = por %p131, %p132
      %p135 = scmp.ne.s32.totalorder %s120, %s134
      %p136 = scmp.eq.s32.totalorder %s26, 0
      %p137 = por %p135, %p136
      %s139 = sadd.s32 %s138, 1
      %p142 = scmp.eq.s32.totalorder %s20, 1
      %p143 = scmp.ne.s32.totalorder %s138, %s140
      %p144 = scmp.eq.s32.totalorder %s20, 0
      %p145 = por %p143, %p144
      %p146 = scmp.ne.s32.totalorder %s138, %s140
      %p147 = scmp.eq.s32.totalorder %s25, 1
      %p148 = por %p146, %p147
      %p149 = scmp.ne.s32.totalorder %s140, %s141
      %p150 = scmp.eq.s32.totalorder %s25, 0
      %p151 = por %p149, %p150
      %p152 = scmp.ne.s32.totalorder %s140, %s141
      %p153 = scmp.eq.s32.totalorder %s26, 1
      %p154 = por %p152, %p153
      %p156 = scmp.ne.s32.totalorder %s141, %s155
      %p157 = scmp.eq.s32.totalorder %s26, 0
      %p158 = por %p156, %p157
      %s160 = sadd.s32 %s159, 1
      %p163 = scmp.eq.s32.totalorder %s20, 1
      %p164 = scmp.ne.s32.totalorder %s159, %s161
      %p165 = scmp.eq.s32.totalorder %s20, 0
      %p166 = por %p164, %p165
      %p167 = scmp.ne.s32.totalorder %s159, %s161
      %p168 = scmp.eq.s32.totalorder %s25, 1
      %p169 = por %p167, %p168
      %p170 = scmp.ne.s32.totalorder %s161, %s162
      %p171 = scmp.eq.s32.totalorder %s25, 0
      %p172 = por %p170, %p171
      %p173 = scmp.ne.s32.totalorder %s161, %s162
      %p174 = scmp.eq.s32.totalorder %s26, 1
      %p175 = por %p173, %p174
      %p177 = scmp.ne.s32.totalorder %s162, %s176
      %p178 = scmp.eq.s32.totalorder %s26, 0
      %p179 = por %p177, %p178
      %s181 = sadd.s32 %s180, 1
      %p184 = scmp.eq.s32.totalorder %s20, 1
      %p185 = scmp.ne.s32.totalorder %s180, %s182
      %p186 = scmp.eq.s32.totalorder %s20, 0
      %p187 = por %p185, %p186
      %p188 = scmp.ne.s32.totalorder %s180, %s182
      %p189 = scmp.eq.s32.totalorder %s25, 1
      %p190 = por %p188, %p189
      %p191 = scmp.ne.s32.totalorder %s182, %s183
      %p192 = scmp.eq.s32.totalorder %s25, 0
      %p193 = por %p191, %p192
      %p194 = scmp.ne.s32.totalorder %s182, %s183
      %p195 = scmp.eq.s32.totalorder %s26, 1
      %p196 = por %p194, %p195
      %p198 = scmp.ne.s32.totalorder %s183, %s197
      %p199 = scmp.eq.s32.totalorder %s26, 0
      %p200 = por %p198, %p199
      %s202 = sadd.s32 %s201, 1
      %p205 = scmp.eq.s32.totalorder %s20, 1
      %p206 = scmp.ne.s32.totalorder %s201, %s203
      %p207 = scmp.eq.s32.totalorder %s20, 0
      %p208 = por %p206, %p207
      %p209 = scmp.ne.s32.totalorder %s201, %s203
      %p210 = scmp.eq.s32.totalorder %s25, 1
      %p211 = por %p209, %p210
      %p212 = scmp.ne.s32.totalorder %s203, %s204
      %p213 = scmp.eq.s32.totalorder %s25, 0
      %p214 = por %p212, %p213
      %p215 = scmp.ne.s32.totalorder %s203, %s204
      %p216 = scmp.eq.s32.totalorder %s26, 1
      %p217 = por %p215, %p216
      %p219 = scmp.ne.s32.totalorder %s204, %s218
      %p220 = scmp.eq.s32.totalorder %s26, 0
      %p221 = por %p219, %p220
      %s223 = sadd.s32 %s222, 1
      %p226 = scmp.eq.s32.totalorder %s20, 1
      %p227 = scmp.ne.s32.totalorder %s222, %s224
      %p228 = scmp.eq.s32.totalorder %s20, 0
      %p229 = por %p227, %p228
      %p230 = scmp.ne.s32.totalorder %s222, %s224
      %p231 = scmp.eq.s32.totalorder %s25, 1
      %p232 = por %p230, %p231
      %p233 = scmp.ne.s32.totalorder %s224, %s225
      %p234 = scmp.eq.s32.totalorder %s25, 0
      %p235 = por %p233, %p234
      %p236 = scmp.ne.s32.totalorder %s224, %s225
      %p237 = scmp.eq.s32.totalorder %s26, 1
      %p238 = por %p236, %p237
      %p240 = scmp.ne.s32.totalorder %s225, %s239
      %p241 = scmp.eq.s32.totalorder %s26, 0
      %p242 = por %p240, %p241
      %s244 = sadd.s32 %s243, 1
      %p247 = scmp.eq.s32.totalorder %s20, 1
      %p248 = scmp.ne.s32.totalorder %s243, %s245
      %p249 = scmp.eq.s32.totalorder %s20, 0
      %p250 = por %p248, %p249
      %p251 = scmp.ne.s32.totalorder %s243, %s245
      %p252 = scmp.eq.s32.totalorder %s25, 1
      %p253 = por %p251, %p252
      %p254 = scmp.ne.s32.totalorder %s245, %s246
      %p255 = scmp.eq.s32.totalorder %s25, 0
      %p256 = por %p254, %p255
      %p257 = scmp.ne.s32.totalorder %s245, %s246
      %p258 = scmp.eq.s32.totalorder %s26, 1
      %p259 = por %p257, %p258
      %p261 = scmp.ne.s32.totalorder %s246, %s260
      %p262 = scmp.eq.s32.totalorder %s26, 0
      %p263 = por %p261, %p262
      %s264 = ssub.s32 %s20, %s27
      %p265 = scmp.eq.s32.totalorder %s264, 0
      %s267 = sadd.s32 %s266, 1
      %s268 = scalar_select %p265, %s266, %s267
      %p271 = pneg %p265
      %p272 = scmp.eq.s32.totalorder %s20, 1
      %p273 = por %p271, %p272
      %p274 = scmp.ne.s32.totalorder %s266, %s269
      %p275 = scmp.eq.s32.totalorder %s20, 0
      %p276 = por %p274, %p275
      %p277 = scmp.ne.s32.totalorder %s266, %s269
      %p278 = scmp.eq.s32.totalorder %s25, 1
      %p279 = por %p277, %p278
      %p280 = scmp.ne.s32.totalorder %s269, %s270
      %p281 = scmp.eq.s32.totalorder %s25, 0
      %p282 = por %p280, %p281
      %p283 = scmp.ne.s32.totalorder %s269, %s270
      %p284 = scmp.eq.s32.totalorder %s26, 1
      %p285 = por %p283, %p284
      %p287 = scmp.ne.s32.totalorder %s270, %s286
      %p288 = scmp.eq.s32.totalorder %s26, 0
      %p289 = por %p287, %p288
      %p290 = scmp.le.s32.totalorder 1, %s20
      %p291 = scmp.lt.s32.totalorder %s20, 3
      %p292 = pnand %p290, %p291
      %p293 = pneg %p292
      // Predicated region
      $region9: #{tpu_custom_call.1} parent=5 // pred_check
        _
      $region10: #{tpu_custom_call.1} parent=5 // pred_check_branch
        %295 = sbr.rel (%p292) target = $region12
      $region11: #{tpu_custom_call.1} parent=5 // pred_region
        %s296 = ssub.s32 %s20, 1
        // Predicated region
        $region13: #{tpu_custom_call.1} parent=11 // pred_check
          %p297 = pneg %p67
        $region14: #{tpu_custom_call.1} parent=11 // pred_check_branch
          %299 = sbr.rel (%p297) target = $region16
        $region15: #{tpu_custom_call.1} parent=11 // pred_region
          _
        $region16: #{tpu_custom_call.1} parent=11 // pred_fallthru
          _
        // Predicated region
        $region17: #{tpu_custom_call.1} parent=11 // pred_check
          %p300 = pneg %p88
        $region18: #{tpu_custom_call.1} parent=11 // pred_check_branch
          %302 = sbr.rel (%p300) target = $region20
        $region19: #{tpu_custom_call.1} parent=11 // pred_region
          _
        $region20: #{tpu_custom_call.1} parent=11 // pred_fallthru
          _
        // Predicated region
        $region21: #{tpu_custom_call.1} parent=11 // pred_check
          %p303 = pneg %p109
        $region22: #{tpu_custom_call.1} parent=11 // pred_check_branch
          %305 = sbr.rel (%p303) target = $region24
        $region23: #{tpu_custom_call.1} parent=11 // pred_region
          _
        $region24: #{tpu_custom_call.1} parent=11 // pred_fallthru
          _
        // Predicated region
        $region25: #{tpu_custom_call.1} parent=11 // pred_check
          %p306 = pneg %p130
        $region26: #{tpu_custom_call.1} parent=11 // pred_check_branch
          %308 = sbr.rel (%p306) target = $region28
        $region27: #{tpu_custom_call.1} parent=11 // pred_region
          _
        $region28: #{tpu_custom_call.1} parent=11 // pred_fallthru
          _
        // Predicated region
        $region29: #{tpu_custom_call.1} parent=11 // pred_check
          %p309 = pneg %p151
        $region30: #{tpu_custom_call.1} parent=11 // pred_check_branch
          %311 = sbr.rel (%p309) target = $region32
        $region31: #{tpu_custom_call.1} parent=11 // pred_region
          _
        $region32: #{tpu_custom_call.1} parent=11 // pred_fallthru
          _
        // Predicated region
        $region33: #{tpu_custom_call.1} parent=11 // pred_check
          %p312 = pneg %p172
        $region34: #{tpu_custom_call.1} parent=11 // pred_check_branch
          %314 = sbr.rel (%p312) target = $region36
        $region35: #{tpu_custom_call.1} parent=11 // pred_region
          _
        $region36: #{tpu_custom_call.1} parent=11 // pred_fallthru
          _
        // Predicated region
        $region37: #{tpu_custom_call.1} parent=11 // pred_check
          %p315 = pneg %p193
        $region38: #{tpu_custom_call.1} parent=11 // pred_check_branch
          %317 = sbr.rel (%p315) target = $region40
        $region39: #{tpu_custom_call.1} parent=11 // pred_region
          _
        $region40: #{tpu_custom_call.1} parent=11 // pred_fallthru
          _
        // Predicated region
        $region41: #{tpu_custom_call.1} parent=11 // pred_check
          %p318 = pneg %p214
        $region42: #{tpu_custom_call.1} parent=11 // pred_check_branch
          %320 = sbr.rel (%p318) target = $region44
        $region43: #{tpu_custom_call.1} parent=11 // pred_region
          _
        $region44: #{tpu_custom_call.1} parent=11 // pred_fallthru
          _
        // Predicated region
        $region45: #{tpu_custom_call.1} parent=11 // pred_check
          %p321 = pneg %p235
        $region46: #{tpu_custom_call.1} parent=11 // pred_check_branch
          %323 = sbr.rel (%p321) target = $region48
        $region47: #{tpu_custom_call.1} parent=11 // pred_region
          _
        $region48: #{tpu_custom_call.1} parent=11 // pred_fallthru
          _
        // Predicated region
        $region49: #{tpu_custom_call.1} parent=11 // pred_check
          %p324 = pneg %p256
        $region50: #{tpu_custom_call.1} parent=11 // pred_check_branch
          %326 = sbr.rel (%p324) target = $region52
        $region51: #{tpu_custom_call.1} parent=11 // pred_region
          _
        $region52: #{tpu_custom_call.1} parent=11 // pred_fallthru
          _
      $region12: #{tpu_custom_call.1} parent=5 // pred_fallthru
        _
      %p327 = scmp.lt.s32.totalorder %s20, 2
      // Predicated region
      $region53: #{tpu_custom_call.1} parent=5 // pred_check
        %p328 = pneg %p327
      $region54: #{tpu_custom_call.1} parent=5 // pred_check_branch
        %330 = sbr.rel (%p328) target = $region56
      $region55: #{tpu_custom_call.1} parent=5 // pred_region
        // Predicated region
        $region57: #{tpu_custom_call.1} parent=55 // pred_check
          %p331 = pneg %p40
        $region58: #{tpu_custom_call.1} parent=55 // pred_check_branch
          %333 = sbr.rel (%p331) target = $region60
        $region59: #{tpu_custom_call.1} parent=55 // pred_region
          %s334 = sand.u32 %s30, 1
          %s335 = sand.u32 %s30, 1
          %s336 = smul.addr %s335, 16
          %s337 = scalar_lea.vmem [#allocation2], %s336
          %s338 = smul.addr %s20, 8
          %s339 = scalar_lea.vmem %s0, %s338
          // Predicated region
          $region61: #{tpu_custom_call.1} parent=59 // pred_check
            _
          $region62: #{tpu_custom_call.1} parent=59 // pred_check_branch
            %341 = sbr.rel (0) target = $region64
          $region63: #{tpu_custom_call.1} parent=59 // pred_region
            // Predicated region
            $region65: #{tpu_custom_call.1} parent=63 // pred_check
              _
            $region66: #{tpu_custom_call.1} parent=63 // pred_check_branch
              %343 = sbr.rel (0) target = $region68
            $region67: #{tpu_custom_call.1} parent=63 // pred_region
              // Predicated region
              $region80: #{tpu_custom_call.1} parent=67 // pred_check
                _
              $region81: #{tpu_custom_call.1} parent=67 // pred_check_branch
                %360 = sbr.rel (0) target = $region83
              $region82: #{tpu_custom_call.1} parent=67 // pred_region
                loop: start=0, step=1, limit=1
                $region84: #{tpu_custom_call.1} parent=82 // loop_pre_header
                  _
                $region85: #{tpu_custom_call.1} parent=82 // loop_header
                  %s362 = sphi 0, %s366
                  %p363 = scmp.ge.s32.totalorder %s362, 1
                  %s367 = sphi %s339, %s339
                  %s368 = sphi %s337, %s337
                $region86: #{tpu_custom_call.1} parent=82 // loop_header_branch
                  %365 = sbr.rel (%p363) target = $region90
                $region87: #{tpu_custom_call.1} parent=82 // loop_body
                  %v369 = vld [vmem:[%s367] sm:$0xff]
                  %370 = vst [vmem:[%s368] sm:$0xff] %v369
                  %v371 = vld [vmem:[%s367 + $0x10] sm:$0xff]
                  %372 = vst [vmem:[%s368 + $0x8] sm:$0xff] %v371
                $region88: #{tpu_custom_call.1} parent=82 // loop_footer
                  %s366 = sadd.s32 1, %s362
                $region89: #{tpu_custom_call.1} parent=82 // loop_footer_branch
                  %361 = sbr.rel target = $region85
                $region90: #{tpu_custom_call.1} parent=82 // loop_exit
                  _
              $region83: #{tpu_custom_call.1} parent=67 // pred_fallthru
                _
              // Predicated region
              $region91: #{tpu_custom_call.1} parent=67 // pred_check
                _
              $region92: #{tpu_custom_call.1} parent=67 // pred_check_branch
                %374 = sbr.rel target = $region94
              $region93: #{tpu_custom_call.1} parent=67 // pred_region
                _
              $region94: #{tpu_custom_call.1} parent=67 // pred_fallthru
                _
            $region68: #{tpu_custom_call.1} parent=63 // pred_fallthru
              _
            // Predicated region
            $region69: #{tpu_custom_call.1} parent=63 // pred_check
              _
            $region70: #{tpu_custom_call.1} parent=63 // pred_check_branch
              %345 = sbr.rel target = $region72
            $region71: #{tpu_custom_call.1} parent=63 // pred_region
              loop: start=0, step=1, limit=1
              $region73: #{tpu_custom_call.1} parent=71 // loop_pre_header
                _
              $region74: #{tpu_custom_call.1} parent=71 // loop_header
                %s348 = sphi 0, %s352
                %p349 = scmp.ge.s32.totalorder %s348, 1
                %s353 = sphi %s339, %s339
                %s354 = sphi %s337, %s337
              $region75: #{tpu_custom_call.1} parent=71 // loop_header_branch
                %351 = sbr.rel (%p349) target = $region79
              $region76: #{tpu_custom_call.1} parent=71 // loop_body
                %v355 = vld [vmem:[%s353] sm:$0xff]
                %356 = vst [vmem:[%s354] sm:$0xff] %v355
                %v357 = vld [vmem:[%s353 + $0x10] sm:$0xff]
                %358 = vst [vmem:[%s354 + $0x8] sm:$0xff] %v357
              $region77: #{tpu_custom_call.1} parent=71 // loop_footer
                %s352 = sadd.s32 1, %s348
              $region78: #{tpu_custom_call.1} parent=71 // loop_footer_branch
                %347 = sbr.rel target = $region74
              $region79: #{tpu_custom_call.1} parent=71 // loop_exit
                _
            $region72: #{tpu_custom_call.1} parent=63 // pred_fallthru
              _
          $region64: #{tpu_custom_call.1} parent=59 // pred_fallthru
            _
          %375 = vnop
        $region60: #{tpu_custom_call.1} parent=55 // pred_fallthru
          _
      $region56: #{tpu_custom_call.1} parent=5 // pred_fallthru
        _
      %p376 = scmp.le.s32.totalorder 1, %s20
      %p377 = scmp.lt.s32.totalorder %s20, 3
      %p378 = pnand %p376, %p377
      %p379 = pneg %p378
      // Predicated region
      $region95: #{tpu_custom_call.1} parent=5 // pred_check
        _
      $region96: #{tpu_custom_call.1} parent=5 // pred_check_branch
        %381 = sbr.rel (%p378) target = $region98
      $region97: #{tpu_custom_call.1} parent=5 // pred_region
        %s382 = ssub.s32 %s20, 1
        %s383 = sand.u32 %s33, 1
        %s384 = sand.u32 %s33, 1
        %s385 = smul.addr %s384, 16
        %s386 = scalar_lea.vmem [#allocation2], %s385
        // Predicated region
        $region99: #{tpu_custom_call.1} parent=97 // pred_check
          %p387 = pneg %p46
        $region100: #{tpu_custom_call.1} parent=97 // pred_check_branch
          %389 = sbr.rel (%p387) target = $region102
        $region101: #{tpu_custom_call.1} parent=97 // pred_region
          _
        $region102: #{tpu_custom_call.1} parent=97 // pred_fallthru
          _
        %s390 = sand.u32 %s33, 1
        %s391 = sand.u32 %s33, 1
        %s392 = smul.addr %s391, 16
        %s393 = scalar_lea.vmem [#allocation2], %s392
        %p394 = pneg %p46
        %p395 = pneg %p43
        %p396 = pneg %p67
        %p397 = pneg %p64
        %p398 = pneg %p88
        %p399 = pneg %p85
        %p400 = pneg %p109
        %p401 = pneg %p106
        %p402 = pneg %p130
        %p403 = pneg %p127
        %p404 = pneg %p151
        %p405 = pneg %p148
        %p406 = pneg %p172
        %p407 = pneg %p169
        %p408 = pneg %p193
        %p409 = pneg %p190
        %p410 = pneg %p214
        %p411 = pneg %p211
        %p412 = pneg %p235
        %p413 = pneg %p232
        %p414 = pneg %p256
        %p415 = pneg %p253
        %p416 = pneg %p282
        %p417 = pneg %p279
        %s418 = sand.u32 %s269, 1
        %s419 = scalar_lea.sflag [#allocation4], %s418
        %s420 = sand.u32 %s269, 1
        %s421 = smul.addr %s420, 8
        %s422 = scalar_lea.vmem [#allocation3], %s421
        %v423 = vld [vmem:[%s386] sm:$0xff]
        %v424 = vld [vmem:[%s386 + $0x8] sm:$0xff]
        %v425 = vld [vmem:[%s1] sm:$0xff]
        %v426 = vld [vmem:[%s1 + $0x8] sm:$0xff]
        %v427 = vld [vmem:[%s1 + $0x10] sm:$0xff]
        %v428 = vld [vmem:[%s1 + $0x18] sm:$0xff]
        %v429 = vld [vmem:[%s1 + $0x20] sm:$0xff]
        %v430 = vld [vmem:[%s1 + $0x28] sm:$0xff]
        %v431 = vld [vmem:[%s1 + $0x30] sm:$0xff]
        %v432 = vld [vmem:[%s2] sm:$0xff]
        %v433 = vld [vmem:[%s2 + $0x8] sm:$0xff]
        %v434 = vld [vmem:[%s2 + $0x10] sm:$0xff]
        %v435 = vld [vmem:[%s2 + $0x18] sm:$0xff]
        %v436 = vld [vmem:[%s2 + $0x20] sm:$0xff]
        %v437 = vld [vmem:[%s2 + $0x28] sm:$0xff]
        %v438 = vld [vmem:[%s2 + $0x30] sm:$0xff]
        %440 = vset.pattern.permute.xlu0 0
        %441 = vperm.xlu0 %440, %v432
        %v442 = vpop.permute.xlu0 %441
        %445 = vset.pattern.permute.xlu0 0
        %446 = vperm.xlu0 %445, %v433
        %v447 = vpop.permute.xlu0 %446
        %450 = vset.pattern.permute.xlu0 0
        %451 = vperm.xlu0 %450, %v434
        %v452 = vpop.permute.xlu0 %451
        %455 = vset.pattern.permute.xlu0 0
        %456 = vperm.xlu0 %455, %v435
        %v457 = vpop.permute.xlu0 %456
        %460 = vset.pattern.permute.xlu0 0
        %461 = vperm.xlu0 %460, %v436
        %v462 = vpop.permute.xlu0 %461
        %465 = vset.pattern.permute.xlu0 0
        %466 = vperm.xlu0 %465, %v437
        %v467 = vpop.permute.xlu0 %466
        %470 = vset.pattern.permute.xlu0 0
        %471 = vperm.xlu0 %470, %v438
        %v472 = vpop.permute.xlu0 %471
        %vm474 = vcmask 130048
        %v476 = vsel %vm474, %v425, 0
        %v479 = vsel %vm474, %v426, 0
        %v482 = vsel %vm474, %v427, 0
        %v485 = vsel %vm474, %v428, 0
        %v488 = vsel %vm474, %v429, 0
        %v491 = vsel %vm474, %v430, 0
        %v494 = vsel %vm474, %v431, 0
        %496 = vmatprep.subr.mxu0 0.0
        %497 = vmatpush1.msra.mxu0 %v423
        %498 = vmatprep.subr.mxu0 0.0
        %499 = vmatpush1.msra.mxu0 %v424
        %500 = vmatprep.subr.mxu0 0.0
        %501 = vmatpush1.msra.mxu0 0.0
        %502 = vmatprep.subr.mxu0 0.0
        %503 = vmatpush1.msra.mxu0 0.0
        %504 = vmatprep.subr.mxu0 0.0
        %505 = vmatpush1.msra.mxu0 0.0
        %506 = vmatprep.subr.mxu0 0.0
        %507 = vmatpush1.msra.mxu0 0.0
        %508 = vmatprep.subr.mxu0 0.0
        %509 = vmatpush1.msra.mxu0 0.0
        %510 = vmatprep.subr.mxu0 0.0
        %511 = vmatpush1.msra.mxu0 0.0
        %512 = vmatprep.subr.mxu0 0.0
        %513 = vmatpush1.msra.mxu0 0.0
        %514 = vmatprep.subr.mxu0 0.0
        %515 = vmatpush1.msra.mxu0 0.0
        %516 = vmatprep.subr.mxu0 0.0
        %517 = vmatpush1.msra.mxu0 0.0
        %518 = vmatprep.subr.mxu0 0.0
        %519 = vmatpush1.msra.mxu0 0.0
        %520 = vmatprep.subr.mxu0 0.0
        %521 = vmatpush1.msra.mxu0 0.0
        %522 = vmatprep.subr.mxu0 0.0
        %523 = vmatpush1.msra.mxu0 0.0
        %524 = vmatprep.subr.mxu0 0.0
        %525 = vmatpush1.msra.mxu0 0.0
        %526 = vmatprep.subr.mxu0 0.0
        %527 = vmatpush1.msra.mxu0 0.0
        %528 = vmatprep.subr.mxu0 0.0
        %529 = vmatpush1.msra.mxu0 0.0
        %530 = vmatprep.subr.mxu0 0.0
        %531 = vmatpush1.msra.mxu0 0.0
        %532 = vmatprep.subr.mxu0 0.0
        %533 = vmatpush1.msra.mxu0 0.0
        %534 = vmatprep.subr.mxu0 0.0
        %535 = vmatpush1.msra.mxu0 0.0
        %536 = vmatprep.subr.mxu0 0.0
        %537 = vmatpush1.msra.mxu0 0.0
        %538 = vmatprep.subr.mxu0 0.0
        %539 = vmatpush1.msra.mxu0 0.0
        %540 = vmatprep.subr.mxu0 0.0
        %541 = vmatpush1.msra.mxu0 0.0
        %542 = vmatprep.subr.mxu0 0.0
        %543 = vmatpush1.msra.mxu0 0.0
        %544 = vmatprep.subr.mxu0 0.0
        %545 = vmatpush1.msra.mxu0 0.0
        %546 = vmatprep.subr.mxu0 0.0
        %547 = vmatpush1.msra.mxu0 0.0
        %548 = vmatprep.subr.mxu0 0.0
        %549 = vmatpush1.msra.mxu0 0.0
        %550 = vmatprep.subr.mxu0 0.0
        %551 = vmatpush1.msra.mxu0 0.0
        %552 = vmatprep.subr.mxu0 0.0
        %553 = vmatpush1.msra.mxu0 0.0
        %554 = vmatprep.subr.mxu0 0.0
        %555 = vmatpush1.msra.mxu0 0.0
        %556 = vmatprep.subr.mxu0 0.0
        %557 = vmatpush1.msra.mxu0 0.0
        %558 = vmatprep.subr.mxu0 0.0
        %559 = vmatpush1.msra.mxu0 0.0
        %560 = vmatprep.mubr.f32.mxu0 0.0
        %561 = vmatmul.mubr.f32.gmra.mrb[0].mxu0 %v476
        %v562 = vpop.f32.mrb[0].mxu0
        %v563 = vadd.f32 %v442, %v562
        %v564 = vpop.f32.mrb[0].mxu0
        %565 = vmatprep.mubr.f32.mxu0 0.0
        %566 = vmatmul.mubr.f32.gmra.mrb[0].mxu0 %v479
        %v567 = vpop.f32.mrb[0].mxu0
        %v568 = vadd.f32 %v447, %v567
        %v569 = vpop.f32.mrb[0].mxu0
        %570 = vmatprep.mubr.f32.mxu0 0.0
        %571 = vmatmul.mubr.f32.gmra.mrb[0].mxu0 %v482
        %v572 = vpop.f32.mrb[0].mxu0
        %v573 = vadd.f32 %v452, %v572
        %v574 = vpop.f32.mrb[0].mxu0
        %575 = vmatprep.mubr.f32.mxu0 0.0
        %576 = vmatmul.mubr.f32.gmra.mrb[0].mxu0 %v485
        %v577 = vpop.f32.mrb[0].mxu0
        %v578 = vadd.f32 %v457, %v577
        %v579 = vpop.f32.mrb[0].mxu0
        %580 = vmatprep.mubr.f32.mxu0 0.0
        %581 = vmatmul.mubr.f32.gmra.mrb[0].mxu0 %v488
        %v582 = vpop.f32.mrb[0].mxu0
        %v583 = vadd.f32 %v462, %v582
        %v584 = vpop.f32.mrb[0].mxu0
        %585 = vmatprep.mubr.f32.mxu0 0.0
        %586 = vmatmul.mubr.f32.gmra.mrb[0].mxu0 %v491
        %v587 = vpop.f32.mrb[0].mxu0
        %v588 = vadd.f32 %v467, %v587
        %v589 = vpop.f32.mrb[0].mxu0
        %590 = vmatprep.mubr.f32.mxu0 0.0
        %591 = vmatmul.mubr.f32.gmra.mrb[0].mxu0 %v494
        %v592 = vpop.f32.mrb[0].mxu0
        %v593 = vadd.f32 %v472, %v592
        %v594 = vpop.f32.mrb[0].mxu0
        %595 = vdwg.mxu0
        %v596 = vtanh.pop %v563
        %v597 = vtanh.pop %v568
        %v598 = vtanh.pop %v573
        %v599 = vtanh.pop %v578
        %v600 = vtanh.pop %v583
        %v601 = vtanh.pop %v588
        %v602 = vtanh.pop %v593
        %v603 = vld [vmem:[%s3] sm:$0xff]
        %v604 = vld [vmem:[%s3 + $0x8] sm:$0xff]
        %v605 = vld [vmem:[%s3 + $0x10] sm:$0xff]
        %v606 = vld [vmem:[%s3 + $0x18] sm:$0xff]
        %v607 = vld [vmem:[%s3 + $0x20] sm:$0xff]
        %v608 = vld [vmem:[%s3 + $0x28] sm:$0xff]
        %v609 = vld [vmem:[%s3 + $0x30] sm:$0xff]
        %v610 = vld [vmem:[%s4] sm:$0xff]
        %v611 = vld [vmem:[%s4 + $0x8] sm:$0xff]
        %v612 = vld [vmem:[%s4 + $0x10] sm:$0xff]
        %v613 = vld [vmem:[%s4 + $0x18] sm:$0xff]
        %v614 = vld [vmem:[%s4 + $0x20] sm:$0xff]
        %v615 = vld [vmem:[%s4 + $0x28] sm:$0xff]
        %v616 = vld [vmem:[%s4 + $0x30] sm:$0xff]
        %618 = vset.pattern.permute.xlu0 0
        %619 = vperm.xlu0 %618, %v610
        %v620 = vpop.permute.xlu0 %619
        %623 = vset.pattern.permute.xlu0 0
        %624 = vperm.xlu0 %623, %v611
        %v625 = vpop.permute.xlu0 %624
        %628 = vset.pattern.permute.xlu0 0
        %629 = vperm.xlu0 %628, %v612
        %v630 = vpop.permute.xlu0 %629
        %633 = vset.pattern.permute.xlu0 0
        %634 = vperm.xlu0 %633, %v613
        %v635 = vpop.permute.xlu0 %634
        %638 = vset.pattern.permute.xlu0 0
        %639 = vperm.xlu0 %638, %v614
        %v640 = vpop.permute.xlu0 %639
        %643 = vset.pattern.permute.xlu0 0
        %644 = vperm.xlu0 %643, %v615
        %v645 = vpop.permute.xlu0 %644
        %648 = vset.pattern.permute.xlu0 0
        %649 = vperm.xlu0 %648, %v616
        %v650 = vpop.permute.xlu0 %649
        %vm652 = vcmask 457728
        %v654 = vsel %vm652, %v603, 0
        %v657 = vsel %vm652, %v604, 0
        %v660 = vsel %vm652, %v605, 0
        %v663 = vsel %vm652, %v606, 0
        %v666 = vsel %vm652, %v607, 0
        %v669 = vsel %vm652, %v608, 0
        %v672 = vsel %vm652, %v609, 0
        %674 = vmatprep.subr.mxu0 0.0
        %675 = vmatpush1.msra.mxu0 %v596
        %676 = vmatprep.subr.mxu0 0.0
        %677 = vmatpush1.msra.mxu0 %v597
        %678 = vmatprep.subr.mxu0 0.0
        %679 = vmatpush1.msra.mxu0 %v598
        %680 = vmatprep.subr.mxu0 0.0
        %681 = vmatpush1.msra.mxu0 %v599
        %682 = vmatprep.subr.mxu0 0.0
        %683 = vmatpush1.msra.mxu0 %v600
        %684 = vmatprep.subr.mxu0 0.0
        %685 = vmatpush1.msra.mxu0 %v601
        %686 = vmatprep.subr.mxu0 0.0
        %687 = vmatpush1.msra.mxu0 %v602
        %688 = vmatprep.subr.mxu0 0.0
        %689 = vmatpush1.msra.mxu0 0.0
        %690 = vmatprep.subr.mxu0 0.0
        %691 = vmatpush1.msra.mxu0 0.0
        %692 = vmatprep.subr.mxu0 0.0
        %693 = vmatpush1.msra.mxu0 0.0
        %694 = vmatprep.subr.mxu0 0.0
        %695 = vmatpush1.msra.mxu0 0.0
        %696 = vmatprep.subr.mxu0 0.0
        %697 = vmatpush1.msra.mxu0 0.0
        %698 = vmatprep.subr.mxu0 0.0
        %699 = vmatpush1.msra.mxu0 0.0
        %700 = vmatprep.subr.mxu0 0.0
        %701 = vmatpush1.msra.mxu0 0.0
        %702 = vmatprep.subr.mxu0 0.0
        %703 = vmatpush1.msra.mxu0 0.0
        %704 = vmatprep.subr.mxu0 0.0
        %705 = vmatpush1.msra.mxu0 0.0
        %706 = vmatprep.subr.mxu0 0.0
        %707 = vmatpush1.msra.mxu0 0.0
        %708 = vmatprep.subr.mxu0 0.0
        %709 = vmatpush1.msra.mxu0 0.0
        %710 = vmatprep.subr.mxu0 0.0
        %711 = vmatpush1.msra.mxu0 0.0
        %712 = vmatprep.subr.mxu0 0.0
        %713 = vmatpush1.msra.mxu0 0.0
        %714 = vmatprep.subr.mxu0 0.0
        %715 = vmatpush1.msra.mxu0 0.0
        %716 = vmatprep.subr.mxu0 0.0
        %717 = vmatpush1.msra.mxu0 0.0
        %718 = vmatprep.subr.mxu0 0.0
        %719 = vmatpush1.msra.mxu0 0.0
        %720 = vmatprep.subr.mxu0 0.0
        %721 = vmatpush1.msra.mxu0 0.0
        %722 = vmatprep.subr.mxu0 0.0
        %723 = vmatpush1.msra.mxu0 0.0
        %724 = vmatprep.subr.mxu0 0.0
        %725 = vmatpush1.msra.mxu0 0.0
        %726 = vmatprep.subr.mxu0 0.0
        %727 = vmatpush1.msra.mxu0 0.0
        %728 = vmatprep.subr.mxu0 0.0
        %729 = vmatpush1.msra.mxu0 0.0
        %730 = vmatprep.subr.mxu0 0.0
        %731 = vmatpush1.msra.mxu0 0.0
        %732 = vmatprep.subr.mxu0 0.0
        %733 = vmatpush1.msra.mxu0 0.0
        %734 = vmatprep.subr.mxu0 0.0
        %735 = vmatpush1.msra.mxu0 0.0
        %736 = vmatprep.subr.mxu0 0.0
        %737 = vmatpush1.msra.mxu0 0.0
        %738 = vmatprep.mubr.f32.mxu0 0.0
        %739 = vmatmul.mubr.f32.gmra.mrb[0].mxu0 %v654
        %v740 = vpop.f32.mrb[0].mxu0
        %v741 = vadd.f32 %v620, %v740
        %v742 = vpop.f32.mrb[0].mxu0
        %743 = vmatprep.mubr.f32.mxu0 0.0
        %744 = vmatmul.mubr.f32.gmra.mrb[0].mxu0 %v657
        %v745 = vpop.f32.mrb[0].mxu0
        %v746 = vadd.f32 %v625, %v745
        %v747 = vpop.f32.mrb[0].mxu0
        %748 = vmatprep.mubr.f32.mxu0 0.0
        %749 = vmatmul.mubr.f32.gmra.mrb[0].mxu0 %v660
        %v750 = vpop.f32.mrb[0].mxu0
        %v751 = vadd.f32 %v630, %v750
        %v752 = vpop.f32.mrb[0].mxu0
        %753 = vmatprep.mubr.f32.mxu0 0.0
        %754 = vmatmul.mubr.f32.gmra.mrb[0].mxu0 %v663
        %v755 = vpop.f32.mrb[0].mxu0
        %v756 = vadd.f32 %v635, %v755
        %v757 = vpop.f32.mrb[0].mxu0
        %758 = vmatprep.mubr.f32.mxu0 0.0
        %759 = vmatmul.mubr.f32.gmra.mrb[0].mxu0 %v666
        %v760 = vpop.f32.mrb[0].mxu0
        %v761 = vadd.f32 %v640, %v760
        %v762 = vpop.f32.mrb[0].mxu0
        %763 = vmatprep.mubr.f32.mxu0 0.0
        %764 = vmatmul.mubr.f32.gmra.mrb[0].mxu0 %v669
        %v765 = vpop.f32.mrb[0].mxu0
        %v766 = vadd.f32 %v645, %v765
        %v767 = vpop.f32.mrb[0].mxu0
        %768 = vmatprep.mubr.f32.mxu0 0.0
        %769 = vmatmul.mubr.f32.gmra.mrb[0].mxu0 %v672
        %v770 = vpop.f32.mrb[0].mxu0
        %v771 = vadd.f32 %v650, %v770
        %v772 = vpop.f32.mrb[0].mxu0
        %773 = vdwg.mxu0
        %v774 = vtanh.pop %v741
        %v775 = vtanh.pop %v746
        %v776 = vtanh.pop %v751
        %v777 = vtanh.pop %v756
        %v778 = vtanh.pop %v761
        %v779 = vtanh.pop %v766
        %v780 = vtanh.pop %v771
        %v781 = vld [vmem:[%s5] sm:$0xff]
        %v782 = vld [vmem:[%s5 + $0x8] sm:$0xff]
        %v783 = vld [vmem:[%s5 + $0x10] sm:$0xff]
        %v784 = vld [vmem:[%s5 + $0x18] sm:$0xff]
        %v785 = vld [vmem:[%s5 + $0x20] sm:$0xff]
        %v786 = vld [vmem:[%s5 + $0x28] sm:$0xff]
        %v787 = vld [vmem:[%s5 + $0x30] sm:$0xff]
        %v788 = vld [vmem:[%s6] sm:$0xff]
        %v789 = vld [vmem:[%s6 + $0x8] sm:$0xff]
        %v790 = vld [vmem:[%s6 + $0x10] sm:$0xff]
        %v791 = vld [vmem:[%s6 + $0x18] sm:$0xff]
        %v792 = vld [vmem:[%s6 + $0x20] sm:$0xff]
        %v793 = vld [vmem:[%s6 + $0x28] sm:$0xff]
        %v794 = vld [vmem:[%s6 + $0x30] sm:$0xff]
        %796 = vset.pattern.permute.xlu0 0
        %797 = vperm.xlu0 %796, %v788
        %v798 = vpop.permute.xlu0 %797
        %801 = vset.pattern.permute.xlu0 0
        %802 = vperm.xlu0 %801, %v789
        %v803 = vpop.permute.xlu0 %802
        %806 = vset.pattern.permute.xlu0 0
        %807 = vperm.xlu0 %806, %v790
        %v808 = vpop.permute.xlu0 %807
        %811 = vset.pattern.permute.xlu0 0
        %812 = vperm.xlu0 %811, %v791
        %v813 = vpop.permute.xlu0 %812
        %816 = vset.pattern.permute.xlu0 0
        %817 = vperm.xlu0 %816, %v792
        %v818 = vpop.permute.xlu0 %817
        %821 = vset.pattern.permute.xlu0 0
        %822 = vperm.xlu0 %821, %v793
        %v823 = vpop.permute.xlu0 %822
        %826 = vset.pattern.permute.xlu0 0
        %827 = vperm.xlu0 %826, %v794
        %v828 = vpop.permute.xlu0 %827
        %v831 = vsel %vm652, %v781, 0
        %v834 = vsel %vm652, %v782, 0
        %v837 = vsel %vm652, %v783, 0
        %v840 = vsel %vm652, %v784, 0
        %v843 = vsel %vm652, %v785, 0
        %v846 = vsel %vm652, %v786, 0
        %v849 = vsel %vm652, %v787, 0
        %851 = vmatprep.subr.mxu0 0.0
        %852 = vmatpush1.msra.mxu0 %v774
        %853 = vmatprep.subr.mxu0 0.0
        %854 = vmatpush1.msra.mxu0 %v775
        %855 = vmatprep.subr.mxu0 0.0
        %856 = vmatpush1.msra.mxu0 %v776
        %857 = vmatprep.subr.mxu0 0.0
        %858 = vmatpush1.msra.mxu0 %v777
        %859 = vmatprep.subr.mxu0 0.0
        %860 = vmatpush1.msra.mxu0 %v778
        %861 = vmatprep.subr.mxu0 0.0
        %862 = vmatpush1.msra.mxu0 %v779
        %863 = vmatprep.subr.mxu0 0.0
        %864 = vmatpush1.msra.mxu0 %v780
        %865 = vmatprep.subr.mxu0 0.0
        %866 = vmatpush1.msra.mxu0 0.0
        %867 = vmatprep.subr.mxu0 0.0
        %868 = vmatpush1.msra.mxu0 0.0
        %869 = vmatprep.subr.mxu0 0.0
        %870 = vmatpush1.msra.mxu0 0.0
        %871 = vmatprep.subr.mxu0 0.0
        %872 = vmatpush1.msra.mxu0 0.0
        %873 = vmatprep.subr.mxu0 0.0
        %874 = vmatpush1.msra.mxu0 0.0
        %875 = vmatprep.subr.mxu0 0.0
        %876 = vmatpush1.msra.mxu0 0.0
        %877 = vmatprep.subr.mxu0 0.0
        %878 = vmatpush1.msra.mxu0 0.0
        %879 = vmatprep.subr.mxu0 0.0
        %880 = vmatpush1.msra.mxu0 0.0
        %881 = vmatprep.subr.mxu0 0.0
        %882 = vmatpush1.msra.mxu0 0.0
        %883 = vmatprep.subr.mxu0 0.0
        %884 = vmatpush1.msra.mxu0 0.0
        %885 = vmatprep.subr.mxu0 0.0
        %886 = vmatpush1.msra.mxu0 0.0
        %887 = vmatprep.subr.mxu0 0.0
        %888 = vmatpush1.msra.mxu0 0.0
        %889 = vmatprep.subr.mxu0 0.0
        %890 = vmatpush1.msra.mxu0 0.0
        %891 = vmatprep.subr.mxu0 0.0
        %892 = vmatpush1.msra.mxu0 0.0
        %893 = vmatprep.subr.mxu0 0.0
        %894 = vmatpush1.msra.mxu0 0.0
        %895 = vmatprep.subr.mxu0 0.0
        %896 = vmatpush1.msra.mxu0 0.0
        %897 = vmatprep.subr.mxu0 0.0
        %898 = vmatpush1.msra.mxu0 0.0
        %899 = vmatprep.subr.mxu0 0.0
        %900 = vmatpush1.msra.mxu0 0.0
        %901 = vmatprep.subr.mxu0 0.0
        %902 = vmatpush1.msra.mxu0 0.0
        %903 = vmatprep.subr.mxu0 0.0
        %904 = vmatpush1.msra.mxu0 0.0
        %905 = vmatprep.subr.mxu0 0.0
        %906 = vmatpush1.msra.mxu0 0.0
        %907 = vmatprep.subr.mxu0 0.0
        %908 = vmatpush1.msra.mxu0 0.0
        %909 = vmatprep.subr.mxu0 0.0
        %910 = vmatpush1.msra.mxu0 0.0
        %911 = vmatprep.subr.mxu0 0.0
        %912 = vmatpush1.msra.mxu0 0.0
        %913 = vmatprep.subr.mxu0 0.0
        %914 = vmatpush1.msra.mxu0 0.0
        %915 = vmatprep.mubr.f32.mxu0 0.0
        %916 = vmatmul.mubr.f32.gmra.mrb[0].mxu0 %v831
        %v917 = vpop.f32.mrb[0].mxu0
        %v918 = vadd.f32 %v798, %v917
        %v919 = vpop.f32.mrb[0].mxu0
        %920 = vmatprep.mubr.f32.mxu0 0.0
        %921 = vmatmul.mubr.f32.gmra.mrb[0].mxu0 %v834
        %v922 = vpop.f32.mrb[0].mxu0
        %v923 = vadd.f32 %v803, %v922
        %v924 = vpop.f32.mrb[0].mxu0
        %925 = vmatprep.mubr.f32.mxu0 0.0
        %926 = vmatmul.mubr.f32.gmra.mrb[0].mxu0 %v837
        %v927 = vpop.f32.mrb[0].mxu0
        %v928 = vadd.f32 %v808, %v927
        %v929 = vpop.f32.mrb[0].mxu0
        %930 = vmatprep.mubr.f32.mxu0 0.0
        %931 = vmatmul.mubr.f32.gmra.mrb[0].mxu0 %v840
        %v932 = vpop.f32.mrb[0].mxu0
        %v933 = vadd.f32 %v813, %v932
        %v934 = vpop.f32.mrb[0].mxu0
        %935 = vmatprep.mubr.f32.mxu0 0.0
        %936 = vmatmul.mubr.f32.gmra.mrb[0].mxu0 %v843
        %v937 = vpop.f32.mrb[0].mxu0
        %v938 = vadd.f32 %v818, %v937
        %v939 = vpop.f32.mrb[0].mxu0
        %940 = vmatprep.mubr.f32.mxu0 0.0
        %941 = vmatmul.mubr.f32.gmra.mrb[0].mxu0 %v846
        %v942 = vpop.f32.mrb[0].mxu0
        %v943 = vadd.f32 %v823, %v942
        %v944 = vpop.f32.mrb[0].mxu0
        %945 = vmatprep.mubr.f32.mxu0 0.0
        %946 = vmatmul.mubr.f32.gmra.mrb[0].mxu0 %v849
        %v947 = vpop.f32.mrb[0].mxu0
        %v948 = vadd.f32 %v828, %v947
        %v949 = vpop.f32.mrb[0].mxu0
        %950 = vdwg.mxu0
        %v951 = vtanh.pop %v918
        %v952 = vtanh.pop %v923
        %v953 = vtanh.pop %v928
        %v954 = vtanh.pop %v933
        %v955 = vtanh.pop %v938
        %v956 = vtanh.pop %v943
        %v957 = vtanh.pop %v948
        %v958 = vld [vmem:[%s7] sm:$0xff]
        %v959 = vld [vmem:[%s7 + $0x8] sm:$0xff]
        %v960 = vld [vmem:[%s7 + $0x10] sm:$0xff]
        %v961 = vld [vmem:[%s7 + $0x18] sm:$0xff]
        %v962 = vld [vmem:[%s7 + $0x20] sm:$0xff]
        %v963 = vld [vmem:[%s7 + $0x28] sm:$0xff]
        %v964 = vld [vmem:[%s7 + $0x30] sm:$0xff]
        %v965 = vld [vmem:[%s8] sm:$0xff]
        %v966 = vld [vmem:[%s8 + $0x8] sm:$0xff]
        %v967 = vld [vmem:[%s8 + $0x10] sm:$0xff]
        %v968 = vld [vmem:[%s8 + $0x18] sm:$0xff]
        %v969 = vld [vmem:[%s8 + $0x20] sm:$0xff]
        %v970 = vld [vmem:[%s8 + $0x28] sm:$0xff]
        %v971 = vld [vmem:[%s8 + $0x30] sm:$0xff]
        %973 = vset.pattern.permute.xlu0 0
        %974 = vperm.xlu0 %973, %v965
        %v975 = vpop.permute.xlu0 %974
        %978 = vset.pattern.permute.xlu0 0
        %979 = vperm.xlu0 %978, %v966
        %v980 = vpop.permute.xlu0 %979
        %983 = vset.pattern.permute.xlu0 0
        %984 = vperm.xlu0 %983, %v967
        %v985 = vpop.permute.xlu0 %984
        %988 = vset.pattern.permute.xlu0 0
        %989 = vperm.xlu0 %988, %v968
        %v990 = vpop.permute.xlu0 %989
        %993 = vset.pattern.permute.xlu0 0
        %994 = vperm.xlu0 %993, %v969
        %v995 = vpop.permute.xlu0 %994
        %998 = vset.pattern.permute.xlu0 0
        %999 = vperm.xlu0 %998, %v970
        %v1000 = vpop.permute.xlu0 %999
        %1003 = vset.pattern.permute.xlu0 0
        %1004 = vperm.xlu0 %1003, %v971
        %v1005 = vpop.permute.xlu0 %1004
        %v1008 = vsel %vm652, %v958, 0
        %v1011 = vsel %vm652, %v959, 0
        %v1014 = vsel %vm652, %v960, 0
        %v1017 = vsel %vm652, %v961, 0
        %v1020 = vsel %vm652, %v962, 0
        %v1023 = vsel %vm652, %v963, 0
        %v1026 = vsel %vm652, %v964, 0
        %1028 = vmatprep.subr.mxu0 0.0
        %1029 = vmatpush1.msra.mxu0 %v951
        %1030 = vmatprep.subr.mxu0 0.0
        %1031 = vmatpush1.msra.mxu0 %v952
        %1032 = vmatprep.subr.mxu0 0.0
        %1033 = vmatpush1.msra.mxu0 %v953
        %1034 = vmatprep.subr.mxu0 0.0
        %1035 = vmatpush1.msra.mxu0 %v954
        %1036 = vmatprep.subr.mxu0 0.0
        %1037 = vmatpush1.msra.mxu0 %v955
        %1038 = vmatprep.subr.mxu0 0.0
        %1039 = vmatpush1.msra.mxu0 %v956
        %1040 = vmatprep.subr.mxu0 0.0
        %1041 = vmatpush1.msra.mxu0 %v957
        %1042 = vmatprep.subr.mxu0 0.0
        %1043 = vmatpush1.msra.mxu0 0.0
        %1044 = vmatprep.subr.mxu0 0.0
        %1045 = vmatpush1.msra.mxu0 0.0
        %1046 = vmatprep.subr.mxu0 0.0
        %1047 = vmatpush1.msra.mxu0 0.0
        %1048 = vmatprep.subr.mxu0 0.0
        %1049 = vmatpush1.msra.mxu0 0.0
        %1050 = vmatprep.subr.mxu0 0.0
        %1051 = vmatpush1.msra.mxu0 0.0
        %1052 = vmatprep.subr.mxu0 0.0
        %1053 = vmatpush1.msra.mxu0 0.0
        %1054 = vmatprep.subr.mxu0 0.0
        %1055 = vmatpush1.msra.mxu0 0.0
        %1056 = vmatprep.subr.mxu0 0.0
        %1057 = vmatpush1.msra.mxu0 0.0
        %1058 = vmatprep.subr.mxu0 0.0
        %1059 = vmatpush1.msra.mxu0 0.0
        %1060 = vmatprep.subr.mxu0 0.0
        %1061 = vmatpush1.msra.mxu0 0.0
        %1062 = vmatprep.subr.mxu0 0.0
        %1063 = vmatpush1.msra.mxu0 0.0
        %1064 = vmatprep.subr.mxu0 0.0
        %1065 = vmatpush1.msra.mxu0 0.0
        %1066 = vmatprep.subr.mxu0 0.0
        %1067 = vmatpush1.msra.mxu0 0.0
        %1068 = vmatprep.subr.mxu0 0.0
        %1069 = vmatpush1.msra.mxu0 0.0
        %1070 = vmatprep.subr.mxu0 0.0
        %1071 = vmatpush1.msra.mxu0 0.0
        %1072 = vmatprep.subr.mxu0 0.0
        %1073 = vmatpush1.msra.mxu0 0.0
        %1074 = vmatprep.subr.mxu0 0.0
        %1075 = vmatpush1.msra.mxu0 0.0
        %1076 = vmatprep.subr.mxu0 0.0
        %1077 = vmatpush1.msra.mxu0 0.0
        %1078 = vmatprep.subr.mxu0 0.0
        %1079 = vmatpush1.msra.mxu0 0.0
        %1080 = vmatprep.subr.mxu0 0.0
        %1081 = vmatpush1.msra.mxu0 0.0
        %1082 = vmatprep.subr.mxu0 0.0
        %1083 = vmatpush1.msra.mxu0 0.0
        %1084 = vmatprep.subr.mxu0 0.0
        %1085 = vmatpush1.msra.mxu0 0.0
        %1086 = vmatprep.subr.mxu0 0.0
        %1087 = vmatpush1.msra.mxu0 0.0
        %1088 = vmatprep.subr.mxu0 0.0
        %1089 = vmatpush1.msra.mxu0 0.0
        %1090 = vmatprep.subr.mxu0 0.0
        %1091 = vmatpush1.msra.mxu0 0.0
        %1092 = vmatprep.mubr.f32.mxu0 0.0
        %1093 = vmatmul.mubr.f32.gmra.mrb[0].mxu0 %v1008
        %v1094 = vpop.f32.mrb[0].mxu0
        %v1095 = vadd.f32 %v975, %v1094
        %v1096 = vpop.f32.mrb[0].mxu0
        %1097 = vmatprep.mubr.f32.mxu0 0.0
        %1098 = vmatmul.mubr.f32.gmra.mrb[0].mxu0 %v1011
        %v1099 = vpop.f32.mrb[0].mxu0
        %v1100 = vadd.f32 %v980, %v1099
        %v1101 = vpop.f32.mrb[0].mxu0
        %1102 = vmatprep.mubr.f32.mxu0 0.0
        %1103 = vmatmul.mubr.f32.gmra.mrb[0].mxu0 %v1014
        %v1104 = vpop.f32.mrb[0].mxu0
        %v1105 = vadd.f32 %v985, %v1104
        %v1106 = vpop.f32.mrb[0].mxu0
        %1107 = vmatprep.mubr.f32.mxu0 0.0
        %1108 = vmatmul.mubr.f32.gmra.mrb[0].mxu0 %v1017
        %v1109 = vpop.f32.mrb[0].mxu0
        %v1110 = vadd.f32 %v990, %v1109
        %v1111 = vpop.f32.mrb[0].mxu0
        %1112 = vmatprep.mubr.f32.mxu0 0.0
        %1113 = vmatmul.mubr.f32.gmra.mrb[0].mxu0 %v1020
        %v1114 = vpop.f32.mrb[0].mxu0
        %v1115 = vadd.f32 %v995, %v1114
        %v1116 = vpop.f32.mrb[0].mxu0
        %1117 = vmatprep.mubr.f32.mxu0 0.0
        %1118 = vmatmul.mubr.f32.gmra.mrb[0].mxu0 %v1023
        %v1119 = vpop.f32.mrb[0].mxu0
        %v1120 = vadd.f32 %v1000, %v1119
        %v1121 = vpop.f32.mrb[0].mxu0
        %1122 = vmatprep.mubr.f32.mxu0 0.0
        %1123 = vmatmul.mubr.f32.gmra.mrb[0].mxu0 %v1026
        %v1124 = vpop.f32.mrb[0].mxu0
        %v1125 = vadd.f32 %v1005, %v1124
        %v1126 = vpop.f32.mrb[0].mxu0
        %1127 = vdwg.mxu0
        %v1128 = vtanh.pop %v1095
        %v1129 = vtanh.pop %v1100
        %v1130 = vtanh.pop %v1105
        %v1131 = vtanh.pop %v1110
        %v1132 = vtanh.pop %v1115
        %v1133 = vtanh.pop %v1120
        %v1134 = vtanh.pop %v1125
        %v1135 = vld [vmem:[%s9] sm:$0xff]
        %v1136 = vld [vmem:[%s10] sm:$0xff]
        %1138 = vset.pattern.permute.xlu0 0
        %1139 = vperm.xlu0 %1138, %v1136
        %v1140 = vpop.permute.xlu0 %1139
        %v1143 = vsel %vm652, %v1135, 0
        %1145 = vmatprep.subr.mxu0 0.0
        %1146 = vmatpush1.msra.mxu0 %v1128
        %1147 = vmatprep.subr.mxu0 0.0
        %1148 = vmatpush1.msra.mxu0 %v1129
        %1149 = vmatprep.subr.mxu0 0.0
        %1150 = vmatpush1.msra.mxu0 %v1130
        %1151 = vmatprep.subr.mxu0 0.0
        %1152 = vmatpush1.msra.mxu0 %v1131
        %1153 = vmatprep.subr.mxu0 0.0
        %1154 = vmatpush1.msra.mxu0 %v1132
        %1155 = vmatprep.subr.mxu0 0.0
        %1156 = vmatpush1.msra.mxu0 %v1133
        %1157 = vmatprep.subr.mxu0 0.0
        %1158 = vmatpush1.msra.mxu0 %v1134
        %1159 = vmatprep.subr.mxu0 0.0
        %1160 = vmatpush1.msra.mxu0 0.0
        %1161 = vmatprep.subr.mxu0 0.0
        %1162 = vmatpush1.msra.mxu0 0.0
        %1163 = vmatprep.subr.mxu0 0.0
        %1164 = vmatpush1.msra.mxu0 0.0
        %1165 = vmatprep.subr.mxu0 0.0
        %1166 = vmatpush1.msra.mxu0 0.0
        %1167 = vmatprep.subr.mxu0 0.0
        %1168 = vmatpush1.msra.mxu0 0.0
        %1169 = vmatprep.subr.mxu0 0.0
        %1170 = vmatpush1.msra.mxu0 0.0
        %1171 = vmatprep.subr.mxu0 0.0
        %1172 = vmatpush1.msra.mxu0 0.0
        %1173 = vmatprep.subr.mxu0 0.0
        %1174 = vmatpush1.msra.mxu0 0.0
        %1175 = vmatprep.subr.mxu0 0.0
        %1176 = vmatpush1.msra.mxu0 0.0
        %1177 = vmatprep.subr.mxu0 0.0
        %1178 = vmatpush1.msra.mxu0 0.0
        %1179 = vmatprep.subr.mxu0 0.0
        %1180 = vmatpush1.msra.mxu0 0.0
        %1181 = vmatprep.subr.mxu0 0.0
        %1182 = vmatpush1.msra.mxu0 0.0
        %1183 = vmatprep.subr.mxu0 0.0
        %1184 = vmatpush1.msra.mxu0 0.0
        %1185 = vmatprep.subr.mxu0 0.0
        %1186 = vmatpush1.msra.mxu0 0.0
        %1187 = vmatprep.subr.mxu0 0.0
        %1188 = vmatpush1.msra.mxu0 0.0
        %1189 = vmatprep.subr.mxu0 0.0
        %1190 = vmatpush1.msra.mxu0 0.0
        %1191 = vmatprep.subr.mxu0 0.0
        %1192 = vmatpush1.msra.mxu0 0.0
        %1193 = vmatprep.subr.mxu0 0.0
        %1194 = vmatpush1.msra.mxu0 0.0
        %1195 = vmatprep.subr.mxu0 0.0
        %1196 = vmatpush1.msra.mxu0 0.0
        %1197 = vmatprep.subr.mxu0 0.0
        %1198 = vmatpush1.msra.mxu0 0.0
        %1199 = vmatprep.subr.mxu0 0.0
        %1200 = vmatpush1.msra.mxu0 0.0
        %1201 = vmatprep.subr.mxu0 0.0
        %1202 = vmatpush1.msra.mxu0 0.0
        %1203 = vmatprep.subr.mxu0 0.0
        %1204 = vmatpush1.msra.mxu0 0.0
        %1205 = vmatprep.subr.mxu0 0.0
        %1206 = vmatpush1.msra.mxu0 0.0
        %1207 = vmatprep.subr.mxu0 0.0
        %1208 = vmatpush1.msra.mxu0 0.0
        %1209 = vmatprep.mubr.f32.mxu0 0.0
        %1210 = vmatmul.mubr.f32.gmra.mrb[0].mxu0 %v1143
        %v1211 = vpop.f32.mrb[0].mxu0
        %v1212 = vadd.f32 %v1140, %v1211
        %v1213 = vpop.f32.mrb[0].mxu0
        %1214 = vdwg.mxu0
        %1215 = vst [vmem:[%s422] sm:$0xff] %v1212
        %s1216 = sand.u32 %s269, 1
        %s1217 = scalar_lea.sflag [#allocation4], %s1216
        %s1218 = sand.u32 %s269, 1
        %s1219 = smul.addr %s1218, 8
        %s1220 = scalar_lea.vmem [#allocation3], %s1219
        // Predicated region
        $region103: #{tpu_custom_call.1} parent=97 // pred_check
          %p1221 = pneg %p279
        $region104: #{tpu_custom_call.1} parent=97 // pred_check_branch
          %1223 = sbr.rel (%p1221) target = $region106
        $region105: #{tpu_custom_call.1} parent=97 // pred_region
          %s1225 = ssub.s32 128, 128
          %1226 = vsyncadd %s1217, %s1225
          %s1227 = smul.addr %s25, 128
          %s1228 = scalar_lea.hbm %s11, %s1227
          %s1230 = sshll.u32 %s1220, 4
          %s1231 = int_to_ptr.vmem [resolvable:$true] %s1230
          %1233 = dma.vmem_to_hbm [thread:$0]  %s1231, 128, %s1228, %s1217
        $region106: #{tpu_custom_call.1} parent=97 // pred_fallthru
          _
      $region98: #{tpu_custom_call.1} parent=5 // pred_fallthru
        _
      %p1234 = scmp.le.s32.totalorder 2, %s20
      // Predicated region
      $region107: #{tpu_custom_call.1} parent=5 // pred_check
        %p1235 = pneg %p1234
      $region108: #{tpu_custom_call.1} parent=5 // pred_check_branch
        %1237 = sbr.rel (%p1235) target = $region110
      $region109: #{tpu_custom_call.1} parent=5 // pred_region
        %s1238 = ssub.s32 %s20, 2
        // Predicated region
        $region111: #{tpu_custom_call.1} parent=109 // pred_check
          %p1239 = pneg %p285
        $region112: #{tpu_custom_call.1} parent=109 // pred_check_branch
          %1241 = sbr.rel (%p1239) target = $region114
        $region113: #{tpu_custom_call.1} parent=109 // pred_region
          %s1242 = sand.u32 %s270, 1
          %s1243 = scalar_lea.sflag [#allocation4], %s1242
          %s1244 = sand.u32 %s270, 1
          %s1245 = smul.addr %s1244, 8
          %s1246 = scalar_lea.vmem [#allocation3], %s1245
          %1247 = dma.done %s1243, 128
        $region114: #{tpu_custom_call.1} parent=109 // pred_fallthru
          _
      $region110: #{tpu_custom_call.1} parent=5 // pred_fallthru
        _
    $region6: #{tpu_custom_call.1} parent=1 // loop_footer
      %s24 = sadd.s32 1, %s20
    $region7: #{tpu_custom_call.1} parent=1 // loop_footer_branch
      %19 = sbr.rel target = $region3
    $region8: #{tpu_custom_call.1} parent=1 // loop_exit
      _
    %1248 = vsyncpa [#allocation4], 1
    %s1249 = scalar_lea.sflag [#allocation4], 1
    %1250 = vsyncpa %s1249, 1

</llo_original>
